<compile_context>
chip_gen: v6e
topology: v6e:2x2x1
jax: 0.10.0
libtpu: 0.0.40
codegen_flags: <defaults>
</compile_context>

<pallas_src>
import math

import jax
import jax.numpy as jnp
from jax.experimental import pallas as pl
from jax.experimental.pallas import tpu as pltpu


def _conv_embed_kernel(x_ref, w_ref, o_ref):
    """One grid step of the fused im2col GEMM (bias folded into the weight).

    x_ref: (TM, K*C_in+1)      im2col rows (+ ones column); row r = l*N + n
    w_ref: (K*C_in+1, TN)      fused (conv_w | conv_b) -> projection -> scale
    o_ref: (TM, TN)
    """
    o_ref[...] = jnp.dot(
        x_ref[...], w_ref[...], preferred_element_type=jnp.float32
    ).astype(o_ref.dtype)


def conv_embeddings_forward(inp, conv_w, conv_b, proj_w, *, conv_size,
                            block_rows=1024, compute_dtype=jnp.float32,
                            out_dtype=jnp.float32):
    """ConvEmbeddings.forward.

    inp:    (L, N, C_in=4) float32
    conv_w: (d_embed, C_in, K)  nn.Conv1d weight
    conv_b: (d_embed,)          nn.Conv1d bias
    proj_w: (d_proj, d_embed) or None (None <=> d_proj == d_embed)
    Returns (L_out, N, d_proj) out_dtype.
    """
    L, N, C_in = inp.shape
    d_embed = conv_w.shape[0]
    K = conv_size
    pad = K // 2
    L_out = L + 2 * pad - K + 1
    d_proj = d_embed if proj_w is None else proj_w.shape[0]
    emb_scale = float(d_proj) ** 0.5
    Kc = K * C_in + 1                          # +1: bias folded as ones column

    # ---------- plain-JAX glue: pad + im2col in (L_out, N) row order ---------
    # Keep the original (L, N, C) layout: pad along L, slice K shifted windows.
    # Row (l, n) of the result is exactly the receptive field of output l for
    # batch n, so out2d.reshape(L_out, N, d_proj) needs NO final transpose.
    x_pad = jnp.pad(inp.astype(compute_dtype),
                    ((pad, pad), (0, 0), (0, 0)))           # (L_pad, N, C_in)
    cols = jnp.concatenate([x_pad[k:k + L_out] for k in range(K)],
                           axis=-1)                         # (L_out, N, K*C_in)
    R = L_out * N
    ones = jnp.ones((R, 1), dtype=compute_dtype)
    x2d = jnp.concatenate([cols.reshape(R, K * C_in), ones], axis=-1)  # (R, Kc)

    # ------------- weight fusion: conv o projection o emb_scale --------------
    # Row index of w_flat = k*C_in + c  <->  column block order of the im2col.
    w_flat = jnp.transpose(conv_w, (2, 1, 0)).reshape(K * C_in, d_embed)
    hp = jax.lax.Precision.HIGHEST
    if proj_w is None:
        w_fused = w_flat * emb_scale
        b_fused = conv_b * emb_scale
    else:
        w_fused = jnp.dot(w_flat, proj_w.T, precision=hp) * emb_scale
        b_fused = jnp.dot(conv_b, proj_w.T, precision=hp) * emb_scale
    w_fused = jnp.concatenate([w_fused, b_fused.reshape(1, d_proj)],
                              axis=0).astype(compute_dtype)            # (Kc, d_proj)

    # ------------------------------ tiling -----------------------------------
    comp_bytes = jnp.dtype(compute_dtype).itemsize
    out_bytes = jnp.dtype(out_dtype).itemsize
    row_align = 16 if compute_dtype == jnp.bfloat16 else 8

    # Column axis (only engaged at production d_proj, keeps v7x under 64 MiB).
    if d_proj >= 2048 and d_proj % 256 == 0:
        tn = 1024
    else:
        tn = d_proj
    grid_n = pl.cdiv(d_proj, tn)

    tm = min(block_rows, R)
    if tm < R:
        tm = max(row_align, (tm // row_align) * row_align)
    # Target >= ~16 grid steps (>= ~8 per v7x TensorCore) when R is big enough,
    # so the pipeline always has DMA to hide; leave tiny R as a single block.
    target_steps = 16
    if R >= target_steps * row_align and pl.cdiv(R, tm) * grid_n < target_steps:
        tm = max(row_align, ((R // target_steps) // row_align) * row_align)

    def _footprint(tm_, tn_):
        # Double-buffered blocks, padded to (8, 128) VMEM tiles.
        lane = lambda v: ((v + 127) // 128) * 128
        sub = lambda v: ((v + 7) // 8) * 8
        xb = 2 * sub(tm_) * lane(Kc) * comp_bytes
        wb = 2 * sub(Kc) * lane(tn_) * comp_bytes
        ob = 2 * sub(tm_) * lane(tn_) * out_bytes
        return xb + wb + ob

    vmem_budget = 40 * 1024 * 1024               # headroom under v7x 64 MiB
    while _footprint(tm, tn) > vmem_budget and tm > row_align:
        tm = max(row_align, (tm // 2 // row_align) * row_align)
    grid_m = pl.cdiv(R, tm)
    vmem_limit = min(48 * 1024 * 1024,
                     max(int(_footprint(tm, tn) * 1.5), 16 * 1024 * 1024))

    # NOTE: toy d_proj=16 < 128 lanes means lane-masked output stores; at
    # production, pad d_proj up to a multiple of 128 for full-width vst.
    out2d = pl.pallas_call(
        _conv_embed_kernel,
        out_shape=jax.ShapeDtypeStruct((R, d_proj), out_dtype),
        grid=(grid_m, grid_n),
        in_specs=[
            pl.BlockSpec((tm, Kc), lambda i, j: (i, 0)),
            pl.BlockSpec((Kc, tn), lambda i, j: (0, j)),
        ],
        out_specs=pl.BlockSpec((tm, tn), lambda i, j: (i, j)),
        compiler_params=pltpu.CompilerParams(
            dimension_semantics=("parallel", "parallel"),
            vmem_limit_bytes=vmem_limit,
        ),
    )(x2d, w_fused)

    return out2d.reshape(L_out, N, d_proj)       # already (L_out, N, d_proj)


def _reference(inp, conv_w, conv_b, proj_w, *, conv_size):
    """Pure-JAX reference mirroring the PyTorch op order (full-f32 precision)."""
    L, N, C_in = inp.shape
    d_embed = conv_w.shape[0]
    K = conv_size
    pad = K // 2
    L_out = L + 2 * pad - K + 1
    d_proj = d_embed if proj_w is None else proj_w.shape[0]
    x_nlc = jnp.transpose(inp, (1, 0, 2))
    x_pad = jnp.pad(x_nlc, ((0, 0), (pad, pad), (0, 0)))
    w_kce = jnp.transpose(conv_w, (2, 1, 0))
    acc = jnp.zeros((N, L_out, d_embed), jnp.float32)
    for k in range(K):
        acc = acc + jnp.einsum("nlc,ce->nle", x_pad[:, k:k + L_out, :], w_kce[k],
                               precision="highest")
    acc = acc + conv_b
    if proj_w is not None:
        acc = jnp.einsum("nle,pe->nlp", acc, proj_w, precision="highest")
    out = acc * (float(d_proj) ** 0.5)
    return jnp.transpose(out, (1, 0, 2))


if __name__ == "__main__":
    # Module hyperparameters (small, synthetic).
    d_embed = 32
    d_proj = 16            # != d_embed so the projection branch is exercised
    conv_size = 3

    # Forward-pass input: (seq L, batch N, channels 4)
    L, N, C_in = 8, 2, 4

    key = jax.random.PRNGKey(0)
    k_inp, k_w, k_b, k_p = jax.random.split(key, 4)

    inp = jax.random.normal(k_inp, (L, N, C_in), dtype=jnp.float32)
    # nn.Conv1d(4, d_embed, conv_size) weight: (d_embed, 4, conv_size), bias: (d_embed,)
    fan_in = C_in * conv_size
    bound = 1.0 / math.sqrt(fan_in)
    conv_w = jax.random.uniform(k_w, (d_embed, C_in, conv_size),
                                minval=-bound, maxval=bound, dtype=jnp.float32)
    conv_b = jax.random.uniform(k_b, (d_embed,),
                                minval=-bound, maxval=bound, dtype=jnp.float32)
    # emb_projs[0]: (d_proj, d_embed)
    proj_w = jax.random.normal(k_p, (d_proj, d_embed), dtype=jnp.float32) * 0.02

    out = conv_embeddings_forward(inp, conv_w, conv_b, proj_w, conv_size=conv_size)
    out = jax.block_until_ready(out)

    ref = _reference(inp, conv_w, conv_b, proj_w, conv_size=conv_size)
    assert out.shape == (L, N, d_proj), out.shape
    # Tolerance covers the MXU's default f32 contraction precision (single
    # pass) plus the conv->projection weight-fusion reassociation; pin
    # precision=HIGHEST end-to-end if bit-level f32 parity with PyTorch matters.
    assert jnp.allclose(out, ref, atol=5e-3, rtol=5e-3), "mismatch vs reference"

    print("KERNEL_OK")
</pallas_src>

<mosaic_0001>
module attributes {stable_mosaic.version = 11 : i64} {
  func.func @_conv_embed_kernel(%arg0: i32, %arg1: i32, %arg2: memref<16x13xf32, #tpu.memory_space<vmem>>, %arg3: memref<13x16xf32, #tpu.memory_space<vmem>>, %arg4: memref<16x16xf32, #tpu.memory_space<vmem>>) attributes {dimension_semantics = [#tpu.dimension_semantics<parallel>, #tpu.dimension_semantics<parallel>], iteration_bounds = array<i64: 1, 1>, scalar_prefetch = 0 : i64, scratch_operands = 0 : i64, tpu.core_type = #tpu.core_type<tc>, window_params = [{transform_indices = @transform_0, window_bounds = array<i64: 16, 13>}, {transform_indices = @transform_1, window_bounds = array<i64: 13, 16>}, {transform_indices = @transform_2, window_bounds = array<i64: 16, 16>}]} {
    %c0 = arith.constant 0 : index
    %c0_0 = arith.constant 0 : index
    %0 = vector.load %arg2[%c0, %c0_0] : memref<16x13xf32, #tpu.memory_space<vmem>>, vector<16x13xf32>
    %c0_1 = arith.constant 0 : index
    %c0_2 = arith.constant 0 : index
    %1 = vector.load %arg3[%c0_1, %c0_2] : memref<13x16xf32, #tpu.memory_space<vmem>>, vector<13x16xf32>
    %cst = arith.constant dense<0.000000e+00> : vector<16x16xf32>
    %2 = tpu.matmul %0, %1, %cst {dimension_numbers = #tpu.dot_dimension_numbers<[1], [0], [0], [1], [0, 0, 1, 1], [], []>} : vector<16x13xf32>, vector<13x16xf32>, vector<16x16xf32> -> vector<16x16xf32>
    %c0_3 = arith.constant 0 : index
    %c0_4 = arith.constant 0 : index
    %3 = vector.load %arg4[%c0_3, %c0_4] : memref<16x16xf32, #tpu.memory_space<vmem>>, vector<16x16xf32>
    tpu.vector_store %arg4[%c0_3, %c0_4], %2 {strides = array<i32>} : memref<16x16xf32, #tpu.memory_space<vmem>>, vector<16x16xf32>,
    return
  }
  func.func @transform_0(%arg0: i32, %arg1: i32) -> (i32, i32) {
    %c0_i32 = arith.constant 0 : i32
    %c0_i32_0 = arith.constant 0 : i32
    return %arg0, %c0_i32 : i32, i32
  }
  func.func @transform_1(%arg0: i32, %arg1: i32) -> (i32, i32) {
    %c0_i32 = arith.constant 0 : i32
    %c0_i32_0 = arith.constant 0 : i32
    return %c0_i32, %arg1 : i32, i32
  }
  func.func @transform_2(%arg0: i32, %arg1: i32) -> (i32, i32) {
    %c0_i32 = arith.constant 0 : i32
    return %arg0, %arg1 : i32, i32
  }
}

</mosaic_0001>

<llo_original>
// kernel: tpu_custom_call.1
$region0: #{tpu_custom_call.1}
  #allocation0 [shape = 'u32[]', space=smem, size = 0x4, offset = 0x4, fixed_abs, tag = 'smem constant byte address 0x4 - core index']
  #allocation1 [shape = 'u32[144,128]{1,0:T(1,128)}', space=vmem, size = 0x12000, scoped, tag = 'internal scratch']
  %s0 = inlined_call_operand.hbm [shape: f32[16,13], index: 0, kind: input, shape index: {}]
  %s1 = inlined_call_operand.hbm [shape: f32[13,16], index: 1, kind: input, shape index: {}]
  %s2 = inlined_call_operand.hbm [shape: f32[16,16], index: 2, kind: output, shape index: {}]
  %s3 = sld [smem:[#allocation0]]
  $region26: #{tpu_custom_call.1} parent=0
    _
  %s5 = ssub.s32 1, %s3
  %s6 = scalar_select 0, %s5, %s3
  $region1: #{tpu_custom_call.1} parent=0
    #allocation2 [shape = 'u8[8192]{0}', space=vmem, size = 0x2000, scoped, tag = 'input window, operand 0, single buffered']
    #allocation3 [shape = 's32[1]{0}', space=sflag, size = 0x4, scoped, tag = 'scoped memory for tpu_custom_call.1']
    #allocation4 [shape = 's32[1]{0}', space=sflag, size = 0x4, scoped, tag = 'scoped memory for tpu_custom_call.1']
    #allocation5 [shape = 'u8[8192]{0}', space=vmem, size = 0x2000, scoped, tag = 'input window, operand 1, single buffered']
    #allocation6 [shape = 's32[1]{0}', space=sflag, size = 0x4, scoped, tag = 'scoped memory for tpu_custom_call.1']
    #allocation7 [shape = 'u8[8192]{0}', space=vmem, size = 0x2000, scoped, tag = 'output window, operand 0, single buffered']
    %7 = vsyncpa [#allocation3], 0
    %8 = vsyncpa [#allocation6], 0
    %9 = vsyncpa [#allocation4], 0
    // Predicated region
    $region2: #{tpu_custom_call.1} parent=1 // pred_check
      _
    $region3: #{tpu_custom_call.1} parent=1 // pred_check_branch
      %11 = sbr.rel (0) target = $region5
    $region4: #{tpu_custom_call.1} parent=1 // pred_region
      %s13 = ssub.s32 256, 256
      %14 = vsyncadd [#allocation3], %s13
      %s15 = sshll.u32 [#allocation2], 4
      %s16 = int_to_ptr.vmem [resolvable:$true] %s15
      %21 = dma.hbm_to_vmem [thread:$0]  %s0, 256, %s16, [#allocation3], 128, 128, 8
    $region5: #{tpu_custom_call.1} parent=1 // pred_fallthru
      _
    // Predicated region
    $region6: #{tpu_custom_call.1} parent=1 // pred_check
      _
    $region7: #{tpu_custom_call.1} parent=1 // pred_check_branch
      %23 = sbr.rel (0) target = $region9
    $region8: #{tpu_custom_call.1} parent=1 // pred_region
      %s25 = ssub.s32 256, 256
      %26 = vsyncadd [#allocation6], %s25
      %s27 = sshll.u32 [#allocation5], 4
      %s28 = int_to_ptr.vmem [resolvable:$true] %s27
      %33 = dma.hbm_to_vmem [thread:$0]  %s1, 256, %s28, [#allocation6], 128, 128, 8
    $region9: #{tpu_custom_call.1} parent=1 // pred_fallthru
      _
    // Predicated region
    $region10: #{tpu_custom_call.1} parent=1 // pred_check
      _
    $region11: #{tpu_custom_call.1} parent=1 // pred_check_branch
      %35 = sbr.rel (0) target = $region13
    $region12: #{tpu_custom_call.1} parent=1 // pred_region
      %36 = dma.done [#allocation3], 256
    $region13: #{tpu_custom_call.1} parent=1 // pred_fallthru
      _
    // Predicated region
    $region14: #{tpu_custom_call.1} parent=1 // pred_check
      _
    $region15: #{tpu_custom_call.1} parent=1 // pred_check_branch
      %38 = sbr.rel (0) target = $region17
    $region16: #{tpu_custom_call.1} parent=1 // pred_region
      %39 = dma.done [#allocation6], 256
    $region17: #{tpu_custom_call.1} parent=1 // pred_fallthru
      _
    %v40 = vld [vmem:[#allocation2] sm:$0xff]
    %v41 = vld [vmem:[#allocation2 + $0x8] sm:$0xff]
    %v42 = vld [vmem:[#allocation5] sm:$0xff]
    %v43 = vld [vmem:[#allocation5 + $0x8] sm:$0x1f]
    %vm44 = vcmask 105472
    %v46 = vsel %vm44, %v40, 0
    %v49 = vsel %vm44, %v41, 0
    %vm51 = vcmask 1044480
    %v53 = vsel %vm51, %v43, 0
    %55 = vmatprep.subr.mxu0 0.0
    %56 = vmatpush1.msra.mxu0 0.0
    %57 = vmatprep.subr.mxu0 0.0
    %58 = vmatpush1.msra.mxu0 0.0
    %59 = vmatprep.subr.mxu0 0.0
    %60 = vmatpush1.msra.mxu0 0.0
    %61 = vmatprep.subr.mxu0 0.0
    %62 = vmatpush1.msra.mxu0 0.0
    %63 = vmatprep.subr.mxu0 0.0
    %64 = vmatpush1.msra.mxu0 0.0
    %65 = vmatprep.subr.mxu0 0.0
    %66 = vmatpush1.msra.mxu0 0.0
    %67 = vmatprep.subr.mxu0 0.0
    %68 = vmatpush1.msra.mxu0 0.0
    %69 = vmatprep.subr.mxu0 0.0
    %70 = vmatpush1.msra.mxu0 0.0
    %71 = vmatprep.subr.mxu0 0.0
    %72 = vmatpush1.msra.mxu0 0.0
    %73 = vmatprep.subr.mxu0 0.0
    %74 = vmatpush1.msra.mxu0 0.0
    %75 = vmatprep.subr.mxu0 0.0
    %76 = vmatpush1.msra.mxu0 0.0
    %77 = vmatprep.subr.mxu0 0.0
    %78 = vmatpush1.msra.mxu0 0.0
    %79 = vmatprep.subr.mxu0 0.0
    %80 = vmatpush1.msra.mxu0 0.0
    %81 = vmatprep.subr.mxu0 0.0
    %82 = vmatpush1.msra.mxu0 0.0
    %83 = vmatprep.subr.mxu0 0.0
    %84 = vmatpush1.msra.mxu0 %v53
    %85 = vmatprep.subr.mxu0 0.0
    %86 = vmatpush1.msra.mxu0 %v42
    %87 = vmatprep.subr.mxu0 0.0
    %88 = vmatpush2.msra.mxu0 0.0
    %89 = vmatprep.subr.mxu0 0.0
    %90 = vmatpush2.msra.mxu0 0.0
    %91 = vmatprep.subr.mxu0 0.0
    %92 = vmatpush2.msra.mxu0 0.0
    %93 = vmatprep.subr.mxu0 0.0
    %94 = vmatpush2.msra.mxu0 0.0
    %95 = vmatprep.subr.mxu0 0.0
    %96 = vmatpush2.msra.mxu0 0.0
    %97 = vmatprep.subr.mxu0 0.0
    %98 = vmatpush2.msra.mxu0 0.0
    %99 = vmatprep.subr.mxu0 0.0
    %100 = vmatpush2.msra.mxu0 0.0
    %101 = vmatprep.subr.mxu0 0.0
    %102 = vmatpush2.msra.mxu0 0.0
    %103 = vmatprep.subr.mxu0 0.0
    %104 = vmatpush2.msra.mxu0 0.0
    %105 = vmatprep.subr.mxu0 0.0
    %106 = vmatpush2.msra.mxu0 0.0
    %107 = vmatprep.subr.mxu0 0.0
    %108 = vmatpush2.msra.mxu0 0.0
    %109 = vmatprep.subr.mxu0 0.0
    %110 = vmatpush2.msra.mxu0 0.0
    %111 = vmatprep.subr.mxu0 0.0
    %112 = vmatpush2.msra.mxu0 0.0
    %113 = vmatprep.subr.mxu0 0.0
    %114 = vmatpush2.msra.mxu0 0.0
    %115 = vmatprep.subr.mxu0 0.0
    %116 = vmatpush2.msra.mxu0 0.0
    %117 = vmatprep.subr.mxu0 0.0
    %118 = vmatpush2.msra.mxu0 0.0
    %119 = vmatprep.mubr.f32.mxu0 0.0
    %120 = vmatmul.mubr.f32.gmra.mxu0 %v46
    %v121 = vpop.f32.mrf.mxu0
    %v122 = vadd.f32 0.0, %v121
    %v123 = vpop.f32.mrf.mxu0
    %124 = vmatprep.mubr.f32.mxu0 0.0
    %125 = vmatmul.mubr.f32.gmra.mxu0 %v49
    %v126 = vpop.f32.mrf.mxu0
    %v127 = vadd.f32 0.0, %v126
    %v128 = vpop.f32.mrf.mxu0
    %129 = vdwg.mxu0
    %vm130 = vcmask 130048
    %131 = vst.msk [vmem:[#allocation7] sm:$0xff] %vm130, %v122
    %132 = vst.msk [vmem:[#allocation7 + $0x8] sm:$0xff] %vm130, %v127
    // Predicated region
    $region18: #{tpu_custom_call.1} parent=1 // pred_check
      _
    $region19: #{tpu_custom_call.1} parent=1 // pred_check_branch
      %134 = sbr.rel (0) target = $region21
    $region20: #{tpu_custom_call.1} parent=1 // pred_region
      %s136 = ssub.s32 256, 256
      %137 = vsyncadd [#allocation4], %s136
      %s138 = sshll.u32 [#allocation7], 4
      %s139 = int_to_ptr.vmem [resolvable:$true] %s138
      %144 = dma.vmem_to_hbm [thread:$0]  %s139, 256, %s2, [#allocation4], 128, 128, 8
    $region21: #{tpu_custom_call.1} parent=1 // pred_fallthru
      _
    // Predicated region
    $region22: #{tpu_custom_call.1} parent=1 // pred_check
      _
    $region23: #{tpu_custom_call.1} parent=1 // pred_check_branch
      %146 = sbr.rel (0) target = $region25
    $region24: #{tpu_custom_call.1} parent=1 // pred_region
      %147 = dma.done [#allocation4], 256
    $region25: #{tpu_custom_call.1} parent=1 // pred_fallthru
      _
    %148 = vsyncpa [#allocation3], 1
    %149 = vsyncpa [#allocation6], 1
    %150 = vsyncpa [#allocation4], 1

</llo_original>
